<compile_context>
chip_gen: v6e
topology: v6e:2x2x1
jax: 0.10.0
libtpu: 0.0.40
codegen_flags: <defaults>
</compile_context>

<pallas_src>
import functools
import math

import jax
import jax.numpy as jnp
import numpy as np
from jax.experimental import pallas as pl
from jax.experimental.pallas import tpu as pltpu


# --------------------------------------------------------------------------- #
# Kernel
# --------------------------------------------------------------------------- #
def _se1d_kernel(x_ref, m_ref, w1f_ref, w2_ref, tbrd_ref, o_ref, *, n_rep):
    # x_ref:    (TB, CLp)  native dtype, lane-dense (CLp = Cp*L, multiple of 128)
    # m_ref:    (TB, L)    binary mask in x dtype
    # w1f_ref:  (CLp, H)   first Linear weight with the per-channel segment-sum folded in
    # w2_ref:   (H, Cp)    second Linear weight, (in, out) layout
    # tbrd_ref: (Cp, CLp)  0/1 broadcast of the per-channel scale over L (MXU)
    x = x_ref[...]                                   # (TB, CLp) native
    m = m_ref[...]                                   # (TB, L)   native

    # ---- squeeze: masked mean over the sequence ---------------------------
    n = jnp.sum(m.astype(jnp.float32), axis=1, keepdims=True)    # (TB, 1)
    n = jnp.where(n == 0.0, 1.0, n)                               # n==0 -> 1
    inv_n = 1.0 / n          # exact: n is (TB,1) small ints; approx not worth the error

    # mask broadcast over the channel groups on VPU/XLU (off the MXU)
    m_exp = jnp.tile(m, (1, n_rep))                               # (TB, CLp)
    xm = x * m_exp                                                # native VPU mul

    # ---- excitation: (segment-sum ∘ Linear) fused into one MXU matmul -----
    h = jnp.dot(xm, w1f_ref[...], preferred_element_type=jnp.float32)   # (TB, H)
    h = jnp.maximum(h * inv_n, 0.0)                                      # ReLU
    s = jnp.dot(h, w2_ref[...], preferred_element_type=jnp.float32)     # (TB, Cp)
    s = jax.nn.sigmoid(s)

    # ---- scale: broadcast s over L on the MXU, multiply in native dtype ---
    s_exp = jnp.dot(s.astype(x.dtype), tbrd_ref[...],
                    preferred_element_type=x.dtype)                      # (TB, CLp)
    o_ref[...] = (x * s_exp).astype(o_ref.dtype)


# --------------------------------------------------------------------------- #
# Sizing helpers
# --------------------------------------------------------------------------- #
def _vmem_capacity_bytes():
    try:
        cap = getattr(pltpu.get_tpu_info(), "vmem_capacity_bytes", None)
        if cap:
            return int(cap)
    except Exception:
        pass
    return 128 << 20          # conservative v5e/v6e default if the query fails


def _sublane_align(itemsize):
    # packed sublane tile: f32 -> 8, bf16 -> 16, int8/fp8 -> 32
    return max(8, 32 // int(itemsize))


def _pick_tb(B, CLp, L, itemsize, vmem_cap):
    align = _sublane_align(itemsize)
    if B <= align:
        return B              # tiny batch: one block covering the full batch dim
    # Per-row VMEM demand: 2x double-buffered x + 2x out + ~3 in-kernel
    # (TB, CLp) temporaries (m_exp, xm, s_exp) + the mask block.
    per_row = (7 * CLp + 2 * L) * itemsize
    budget = int(vmem_cap * 0.35)        # ~45 MiB on 128 MiB parts, ~22 MiB on v7x
    tb = max(align, (budget // max(per_row, 1)) // align * align)
    tb = min(tb, 1024)
    # Keep >= 2 grid steps for large batches so dimension_semantics=("parallel",)
    # can shard the batch across v7x's two TensorCores (no effect on v5e/v6e).
    half = -(-(-(-B // 2)) // align) * align          # align(ceil(ceil(B/2)))
    tb = min(tb, max(align, half))
    return tb


# --------------------------------------------------------------------------- #
# Forward wrapper (weights are pre-prepped once by the factory below)
# --------------------------------------------------------------------------- #
def _se1d_forward(x, mask, *, w1f, w2_t, t_brd, C, Cp, L, H):
    B = x.shape[0]
    dtype = x.dtype
    itemsize = jnp.dtype(dtype).itemsize
    CLp = Cp * L

    # Lane-dense fold: (B, C, L) -> (B, Cp*L), zero-padding channels C..Cp so
    # the lane dim is a multiple of 128 (unmasked vst); mask -> (B, L).
    x2 = x.reshape(B, C * L)
    if Cp != C:
        x2 = jnp.pad(x2, ((0, 0), (0, (Cp - C) * L)))
    m2 = mask.reshape(B, L).astype(dtype)

    vmem_cap = _vmem_capacity_bytes()
    TB = _pick_tb(B, CLp, L, itemsize, vmem_cap)
    Bp = pl.cdiv(B, TB) * TB
    if Bp != B:
        # Padded rows: mask sums to 0 -> n forced to 1 -> harmless; sliced off below.
        x2 = jnp.pad(x2, ((0, Bp - B), (0, 0)))
        m2 = jnp.pad(m2, ((0, Bp - B), (0, 0)))

    grid = (Bp // TB,)

    p_item = jnp.dtype(w1f.dtype).itemsize
    resident_once = CLp * H * p_item + H * Cp * p_item + Cp * CLp * itemsize
    # Count residents at 2x in case single-buffering is not honored.
    block_bytes = (7 * CLp + 2 * L) * itemsize * TB
    vmem_limit = block_bytes + 2 * resident_once + (4 << 20)
    vmem_limit = int(min(max(vmem_limit, 16 << 20), int(vmem_cap * 0.6)))

    cost = pl.CostEstimate(
        flops=int(2 * Bp * CLp * H + 2 * Bp * H * Cp + 2 * Bp * Cp * CLp + 4 * Bp * CLp),
        transcendentals=int(Bp * Cp),
        bytes_accessed=int((2 * Bp * CLp + Bp * L) * itemsize + resident_once),
    )

    def resident(shape):
        # Grid-invariant blocks: single-buffer them to halve their VMEM footprint.
        return pl.BlockSpec(shape, lambda b: (0, 0), pipeline_mode=pl.Buffered(1))

    out2 = pl.pallas_call(
        functools.partial(_se1d_kernel, n_rep=Cp),
        out_shape=jax.ShapeDtypeStruct((Bp, CLp), dtype),
        grid_spec=pltpu.PrefetchScalarGridSpec(
            num_scalar_prefetch=0,
            grid=grid,
            in_specs=[
                pl.BlockSpec((TB, CLp), lambda b: (b, 0)),   # x, lane-dense
                pl.BlockSpec((TB, L), lambda b: (b, 0)),     # mask
                resident((CLp, H)),                          # folded W1
                resident((H, Cp)),                           # W2^T
                resident((Cp, CLp)),                         # scale-broadcast matrix
            ],
            out_specs=pl.BlockSpec((TB, CLp), lambda b: (b, 0)),
        ),
        compiler_params=pltpu.CompilerParams(
            dimension_semantics=("parallel",),   # batch axis shards across TCs (v7x)
            vmem_limit_bytes=vmem_limit,
        ),
        cost_estimate=cost,
    )(x2, m2, w1f, w2_t, t_brd)

    return out2[:B, :C * L].reshape(B, C, L)


def make_squeeze_excitation_1d(w1, w2, seq_len, x_dtype=jnp.float32):
    """One-time weight prep; returns jitted fwd(x: (B,C,L), mask: (B,1,L)).

    w1: (H, C) = torch nn.Linear(channel, channel//reduction, bias=False).weight
    w2: (C, H) = torch nn.Linear(channel//reduction, channel, bias=False).weight
    """
    H, C = w1.shape
    L = int(seq_len)
    dtype = jnp.dtype(x_dtype)
    itemsize = dtype.itemsize
    # Keep weights in bf16 when the activations are 16-bit (matmuls still
    # accumulate in f32); pre-transpose once here instead of per call.
    param_dtype = dtype if itemsize == 2 else jnp.float32

    # Pad channels so Cp*L is a multiple of 128 (lane-dense, unmasked stores).
    rep = 128 // math.gcd(L, 128)
    Cp = -(-C // rep) * rep
    CLp = Cp * L
    # TODO(synk): for L with gcd(L,128) == 1 (odd L) this pads Cp to a multiple
    # of 128; an L-tiled layout would waste less padding there.

    w1_t = jnp.zeros((Cp, H), param_dtype).at[:C].set(jnp.asarray(w1, param_dtype).T)
    w2_t = jnp.zeros((H, Cp), param_dtype).at[:, :C].set(jnp.asarray(w2, param_dtype).T)
    # Fold the per-channel segment-sum into the first Linear:
    #   (xm @ t_seg) @ W1^T  ==  xm @ repeat(W1^T, L, axis=0)
    w1f = jnp.repeat(w1_t, L, axis=0)                                    # (CLp, H)
    # 0/1 broadcast of the per-channel scale over L (stays on the MXU).
    k = np.arange(CLp)
    t_brd = jnp.asarray(k[None, :] // L == np.arange(Cp)[:, None], dtype)  # (Cp, CLp)

    fwd = functools.partial(_se1d_forward, w1f=w1f, w2_t=w2_t, t_brd=t_brd,
                            C=C, Cp=Cp, L=L, H=H)
    return jax.jit(fwd)


# --------------------------------------------------------------------------- #
# Pure-JAX reference + self-test
# --------------------------------------------------------------------------- #
def _reference(x, mask, w1, w2):
    n = jnp.sum(mask, axis=2)
    n = jnp.where(n == 0, 1.0, n)
    y = jnp.sum(x * mask, axis=2) / n
    h = jnp.maximum(y @ w1.T, 0.0)
    s = jax.nn.sigmoid(h @ w2.T)
    return x * s[:, :, None]


if __name__ == "__main__":
    # batch=2, channel=32, seq=16, reduction=4 -> hidden=8
    B, C, L, reduction = 2, 32, 16, 4
    H = C // reduction

    key = jax.random.PRNGKey(0)
    kx, km, k1, k2 = jax.random.split(key, 4)

    x = jax.random.normal(kx, (B, C, L), dtype=jnp.float32)
    # binary mask over the sequence, broadcast over channels (shape (B, 1, L))
    mask = (jax.random.uniform(km, (B, 1, L)) > 0.3).astype(jnp.float32)

    # Deterministic "Linear" weights (PyTorch weight shape = (out, in), no bias)
    bound1 = 1.0 / (C ** 0.5)
    bound2 = 1.0 / (H ** 0.5)
    w1 = jax.random.uniform(k1, (H, C), minval=-bound1, maxval=bound1, dtype=jnp.float32)
    w2 = jax.random.uniform(k2, (C, H), minval=-bound2, maxval=bound2, dtype=jnp.float32)

    ref = _reference(x, mask, w1, w2)

    # ---- f32 path (exact 1/n now -> tight tolerance) ----------------------
    se_f32 = make_squeeze_excitation_1d(w1, w2, L, x_dtype=jnp.float32)
    out = jax.block_until_ready(se_f32(x, mask))
    assert jnp.allclose(out, ref, atol=1e-4, rtol=1e-4), "f32 mismatch vs reference"

    # ---- bf16 path (native-dtype I/O, bf16 weights, f32 accumulation) -----
    se_bf16 = make_squeeze_excitation_1d(w1, w2, L, x_dtype=jnp.bfloat16)
    out_bf = jax.block_until_ready(
        se_bf16(x.astype(jnp.bfloat16), mask.astype(jnp.bfloat16)))
    assert jnp.allclose(out_bf.astype(jnp.float32), ref, atol=3e-2, rtol=3e-2), \
        "bf16 mismatch vs reference"

    print("KERNEL_OK")
</pallas_src>

<mosaic_0001>
module attributes {stable_mosaic.version = 11 : i64} {
  func.func @_se1d_kernel(%arg0: i32, %arg1: memref<2x512xf32, #tpu.memory_space<vmem>>, %arg2: memref<2x16xf32, #tpu.memory_space<vmem>>, %arg3: memref<512x8xf32, #tpu.memory_space<vmem>>, %arg4: memref<8x32xf32, #tpu.memory_space<vmem>>, %arg5: memref<32x512xf32, #tpu.memory_space<vmem>>, %arg6: memref<2x512xf32, #tpu.memory_space<vmem>>) attributes {dimension_semantics = [#tpu.dimension_semantics<parallel>], iteration_bounds = array<i64: 1>, scalar_prefetch = 0 : i64, scratch_operands = 0 : i64, tpu.core_type = #tpu.core_type<tc>, window_params = [{transform_indices = @transform_0, window_bounds = array<i64: 2, 512>}, {transform_indices = @transform_1, window_bounds = array<i64: 2, 16>}, {pipeline_mode = #tpu.pipeline_mode<synchronous>, transform_indices = @transform_2, window_bounds = array<i64: 512, 8>}, {pipeline_mode = #tpu.pipeline_mode<synchronous>, transform_indices = @transform_3, window_bounds = array<i64: 8, 32>}, {pipeline_mode = #tpu.pipeline_mode<synchronous>, transform_indices = @transform_4, window_bounds = array<i64: 32, 512>}, {transform_indices = @transform_5, window_bounds = array<i64: 2, 512>}]} {
    %c0 = arith.constant 0 : index
    %c0_0 = arith.constant 0 : index
    %0 = vector.load %arg1[%c0, %c0_0] : memref<2x512xf32, #tpu.memory_space<vmem>>, vector<2x512xf32>
    %c0_1 = arith.constant 0 : index
    %c0_2 = arith.constant 0 : index
    %1 = vector.load %arg2[%c0_1, %c0_2] : memref<2x16xf32, #tpu.memory_space<vmem>>, vector<2x16xf32>
    %cst = arith.constant dense<0.000000e+00> : vector<2xf32>
    %2 = vector.multi_reduction <add>, %1, %cst [1] : vector<2x16xf32> to vector<2xf32>
    %3 = vector.shape_cast %2 : vector<2xf32> to vector<2x1xf32>
    %cst_3 = arith.constant 0.000000e+00 : f32
    %4 = vector.broadcast %cst_3 : f32 to vector<2x1xf32>
    %5 = arith.cmpf oeq, %3, %4 : vector<2x1xf32>
    %cst_4 = arith.constant 1.000000e+00 : f32
    %6 = vector.broadcast %cst_4 : f32 to vector<2x1xf32>
    %7 = arith.select %5, %6, %3 : vector<2x1xi1>, vector<2x1xf32>
    %cst_5 = arith.constant 1.000000e+00 : f32
    %8 = vector.broadcast %cst_5 : f32 to vector<2x1xf32>
    %9 = arith.divf %8, %7 : vector<2x1xf32>
    %10 = tpu.concatenate %1, %1, %1, %1, %1, %1, %1, %1, %1, %1, %1, %1, %1, %1, %1, %1, %1, %1, %1, %1, %1, %1, %1, %1, %1, %1, %1, %1, %1, %1, %1, %1 in 1 : vector<2x16xf32>, vector<2x16xf32>, vector<2x16xf32>, vector<2x16xf32>, vector<2x16xf32>, vector<2x16xf32>, vector<2x16xf32>, vector<2x16xf32>, vector<2x16xf32>, vector<2x16xf32>, vector<2x16xf32>, vector<2x16xf32>, vector<2x16xf32>, vector<2x16xf32>, vector<2x16xf32>, vector<2x16xf32>, vector<2x16xf32>, vector<2x16xf32>, vector<2x16xf32>, vector<2x16xf32>, vector<2x16xf32>, vector<2x16xf32>, vector<2x16xf32>, vector<2x16xf32>, vector<2x16xf32>, vector<2x16xf32>, vector<2x16xf32>, vector<2x16xf32>, vector<2x16xf32>, vector<2x16xf32>, vector<2x16xf32>, vector<2x16xf32> -> vector<2x512xf32>
    %11 = arith.mulf %0, %10 : vector<2x512xf32>
    %c0_6 = arith.constant 0 : index
    %c0_7 = arith.constant 0 : index
    %12 = vector.load %arg3[%c0_6, %c0_7] : memref<512x8xf32, #tpu.memory_space<vmem>>, vector<512x8xf32>
    %cst_8 = arith.constant dense<0.000000e+00> : vector<2x8xf32>
    %13 = tpu.matmul %11, %12, %cst_8 {dimension_numbers = #tpu.dot_dimension_numbers<[1], [0], [0], [1], [0, 0, 1, 1], [], []>} : vector<2x512xf32>, vector<512x8xf32>, vector<2x8xf32> -> vector<2x8xf32>
    %14 = vector.broadcast %9 : vector<2x1xf32> to vector<2x8xf32>
    %15 = arith.mulf %13, %14 : vector<2x8xf32>
    %cst_9 = arith.constant 0.000000e+00 : f32
    %16 = vector.broadcast %cst_9 : f32 to vector<2x8xf32>
    %17 = arith.maximumf %15, %16 : vector<2x8xf32>
    %c0_10 = arith.constant 0 : index
    %c0_11 = arith.constant 0 : index
    %18 = vector.load %arg4[%c0_10, %c0_11] : memref<8x32xf32, #tpu.memory_space<vmem>>, vector<8x32xf32>
    %cst_12 = arith.constant dense<0.000000e+00> : vector<2x32xf32>
    %19 = tpu.matmul %17, %18, %cst_12 {dimension_numbers = #tpu.dot_dimension_numbers<[1], [0], [0], [1], [0, 0, 1, 1], [], []>} : vector<2x8xf32>, vector<8x32xf32>, vector<2x32xf32> -> vector<2x32xf32>
    %20 = arith.negf %19 : vector<2x32xf32>
    %21 = math.exp %20 : vector<2x32xf32>
    %cst_13 = arith.constant 1.000000e+00 : f32
    %22 = vector.broadcast %cst_13 : f32 to vector<2x32xf32>
    %23 = arith.addf %22, %21 : vector<2x32xf32>
    %24 = arith.divf %22, %23 : vector<2x32xf32>
    %c0_14 = arith.constant 0 : index
    %c0_15 = arith.constant 0 : index
    %25 = vector.load %arg5[%c0_14, %c0_15] : memref<32x512xf32, #tpu.memory_space<vmem>>, vector<32x512xf32>
    %cst_16 = arith.constant dense<0.000000e+00> : vector<2x512xf32>
    %26 = tpu.matmul %24, %25, %cst_16 {dimension_numbers = #tpu.dot_dimension_numbers<[1], [0], [0], [1], [0, 0, 1, 1], [], []>} : vector<2x32xf32>, vector<32x512xf32>, vector<2x512xf32> -> vector<2x512xf32>
    %27 = arith.mulf %0, %26 : vector<2x512xf32>
    %c0_17 = arith.constant 0 : index
    %c0_18 = arith.constant 0 : index
    %28 = vector.load %arg6[%c0_17, %c0_18] : memref<2x512xf32, #tpu.memory_space<vmem>>, vector<2x512xf32>
    tpu.vector_store %arg6[%c0_17, %c0_18], %27 {strides = array<i32>} : memref<2x512xf32, #tpu.memory_space<vmem>>, vector<2x512xf32>,
    return
  }
  func.func @transform_0(%arg0: i32) -> (i32, i32) {
    %c0_i32 = arith.constant 0 : i32
    %c0_i32_0 = arith.constant 0 : i32
    return %arg0, %c0_i32 : i32, i32
  }
  func.func @transform_1(%arg0: i32) -> (i32, i32) {
    %c0_i32 = arith.constant 0 : i32
    %c0_i32_0 = arith.constant 0 : i32
    return %arg0, %c0_i32 : i32, i32
  }
  func.func @transform_2(%arg0: i32) -> (i32, i32) {
    %c0_i32 = arith.constant 0 : i32
    %c0_i32_0 = arith.constant 0 : i32
    %c0_i32_1 = arith.constant 0 : i32
    return %c0_i32, %c0_i32_0 : i32, i32
  }
  func.func @transform_3(%arg0: i32) -> (i32, i32) {
    %c0_i32 = arith.constant 0 : i32
    %c0_i32_0 = arith.constant 0 : i32
    %c0_i32_1 = arith.constant 0 : i32
    return %c0_i32, %c0_i32_0 : i32, i32
  }
  func.func @transform_4(%arg0: i32) -> (i32, i32) {
    %c0_i32 = arith.constant 0 : i32
    %c0_i32_0 = arith.constant 0 : i32
    %c0_i32_1 = arith.constant 0 : i32
    return %c0_i32, %c0_i32_0 : i32, i32
  }
  func.func @transform_5(%arg0: i32) -> (i32, i32) {
    %c0_i32 = arith.constant 0 : i32
    %c0_i32_0 = arith.constant 0 : i32
    return %arg0, %c0_i32 : i32, i32
  }
}

</mosaic_0001>

<llo_original>
// kernel: _se1d_forward.1
$region0: #{_se1d_forward.1}
  #allocation0 [shape = 'u32[]', space=smem, size = 0x4, offset = 0x4, fixed_abs, tag = 'smem constant byte address 0x4 - core index']
  #allocation1 [shape = 'u32[144,128]{1,0:T(1,128)}', space=vmem, size = 0x12000, scoped, tag = 'internal scratch']
  %s0 = inlined_call_operand.vmem [shape: f32[2,512], index: 0, kind: input, shape index: {}]
  %s1 = inlined_call_operand.vmem [shape: f32[2,16], index: 1, kind: input, shape index: {}]
  %s2 = inlined_call_operand.hbm [shape: f32[512,8], index: 2, kind: input, shape index: {}]
  %s3 = inlined_call_operand.vmem [shape: f32[8,32], index: 3, kind: input, shape index: {}]
  %s4 = inlined_call_operand.vmem [shape: f32[32,512], index: 4, kind: input, shape index: {}]
  %s5 = inlined_call_operand.vmem [shape: f32[2,512], index: 5, kind: output, shape index: {}]
  %s6 = sld [smem:[#allocation0]]
  $region34: #{_se1d_forward.1} parent=0
    _
  %s8 = ssub.s32 1, %s6
  %s9 = scalar_select 0, %s8, %s6
  $region1: #{_se1d_forward.1} parent=0
    #allocation2 [shape = 'u8[262144]{0}', space=vmem, size = 0x40000, scoped, tag = 'input window, operand 2, single buffered']
    #allocation3 [shape = 's32[1]{0}', space=sflag, size = 0x4, scoped, tag = 'scoped memory for _se1d_forward.1']
    %10 = vsyncpa [#allocation3], 0
    // Predicated region
    $region2: #{_se1d_forward.1} parent=1 // pred_check
      _
    $region3: #{_se1d_forward.1} parent=1 // pred_check_branch
      %12 = sbr.rel (0) target = $region5
    $region4: #{_se1d_forward.1} parent=1 // pred_region
      _
    $region5: #{_se1d_forward.1} parent=1 // pred_fallthru
      _
    // Predicated region
    $region6: #{_se1d_forward.1} parent=1 // pred_check
      _
    $region7: #{_se1d_forward.1} parent=1 // pred_check_branch
      %14 = sbr.rel (0) target = $region9
    $region8: #{_se1d_forward.1} parent=1 // pred_region
      _
    $region9: #{_se1d_forward.1} parent=1 // pred_fallthru
      _
    // Predicated region
    $region10: #{_se1d_forward.1} parent=1 // pred_check
      _
    $region11: #{_se1d_forward.1} parent=1 // pred_check_branch
      %16 = sbr.rel (0) target = $region13
    $region12: #{_se1d_forward.1} parent=1 // pred_region
      %s18 = ssub.s32 8192, 8192
      %19 = vsyncadd [#allocation3], %s18
      %s20 = sshll.u32 [#allocation2], 4
      %s21 = int_to_ptr.vmem [resolvable:$true] %s20
      %26 = dma.hbm_to_vmem [thread:$0]  %s2, 8192, %s21, [#allocation3], 128, 128, 8
    $region13: #{_se1d_forward.1} parent=1 // pred_fallthru
      _
    // Predicated region
    $region14: #{_se1d_forward.1} parent=1 // pred_check
      _
    $region15: #{_se1d_forward.1} parent=1 // pred_check_branch
      %28 = sbr.rel (0) target = $region17
    $region16: #{_se1d_forward.1} parent=1 // pred_region
      _
    $region17: #{_se1d_forward.1} parent=1 // pred_fallthru
      _
    // Predicated region
    $region18: #{_se1d_forward.1} parent=1 // pred_check
      _
    $region19: #{_se1d_forward.1} parent=1 // pred_check_branch
      %30 = sbr.rel (0) target = $region21
    $region20: #{_se1d_forward.1} parent=1 // pred_region
      _
    $region21: #{_se1d_forward.1} parent=1 // pred_fallthru
      _
    // Predicated region
    $region22: #{_se1d_forward.1} parent=1 // pred_check
      _
    $region23: #{_se1d_forward.1} parent=1 // pred_check_branch
      %32 = sbr.rel (0) target = $region25
    $region24: #{_se1d_forward.1} parent=1 // pred_region
      %33 = dma.done [#allocation3], 8192
    $region25: #{_se1d_forward.1} parent=1 // pred_fallthru
      _
    %v34 = vld [vmem:[%s0] sm:$0xff]
    %v35 = vld [vmem:[%s1] sm:$0x3]
    %vm36 = vcmask 123904
    %v37 = vsel %vm36, %v35, 0.0
    %38 = vadd.xlane.f32.xlu0 %v37
    %v39 = vpop.xlane.xlu0 %38
    %vm40 = vcmp.eq.f32.partialorder %v39, 0.0
    %v41 = vsel %vm40, 1.0, %v39
    %v42 = vrcp.pop %v41
    %v43 = vmul.f32 1.0, %v42
    %45 = vrot.lane.b32.xlu0 %v35, 16
    %v46 = vpop.permute.xlu0 %45
    %48 = vrot.lane.b32.xlu0 %v35, 32
    %v49 = vpop.permute.xlu0 %48
    %51 = vrot.lane.b32.xlu0 %v35, 48
    %v52 = vpop.permute.xlu0 %51
    %54 = vrot.lane.b32.xlu0 %v35, 64
    %v55 = vpop.permute.xlu0 %54
    %57 = vrot.lane.b32.xlu0 %v35, 80
    %v58 = vpop.permute.xlu0 %57
    %60 = vrot.lane.b32.xlu0 %v35, 96
    %v61 = vpop.permute.xlu0 %60
    %63 = vrot.lane.b32.xlu0 %v35, 112
    %v64 = vpop.permute.xlu0 %63
    %vm66 = vcmask 130048
    %v67 = vsel %vm66, %v35, %v46
    %vm68 = vcmask 261120
    %v69 = vsel %vm68, %v67, %v49
    %vm70 = vcmask 392192
    %v71 = vsel %vm70, %v69, %v52
    %vm72 = vcmask 523264
    %v73 = vsel %vm72, %v71, %v55
    %vm74 = vcmask 654336
    %v75 = vsel %vm74, %v73, %v58
    %vm76 = vcmask 785408
    %v77 = vsel %vm76, %v75, %v61
    %vm78 = vcmask 916480
    %v79 = vsel %vm78, %v77, %v64
    %v81 = vcombine.low %v79, %v79
    %v83 = vunpack.c.l.s4 1983009808
    %v84 = vunpack.c.0.s8 %v83
    %v85 = vlaneseq
    %v86 = vshrl.u32 %v85, 7
    %v87 = vsub.s32 %v84, %v86
    %v88 = vrot.slane %v81, %v87
    %v89 = vcombine.low %v88, %v88
    %v91 = vmul.f32 %v34, %v89
    %v92 = vld [vmem:[#allocation2] sm:$0xff]
    %v93 = vld [vmem:[#allocation2 + $0x8] sm:$0xff]
    %v94 = vld [vmem:[#allocation2 + $0x10] sm:$0xff]
    %v95 = vld [vmem:[#allocation2 + $0x18] sm:$0xff]
    %v96 = vld [vmem:[#allocation2 + $0x20] sm:$0xff]
    %v97 = vld [vmem:[#allocation2 + $0x28] sm:$0xff]
    %v98 = vld [vmem:[#allocation2 + $0x30] sm:$0xff]
    %v99 = vld [vmem:[#allocation2 + $0x38] sm:$0xff]
    %v100 = vld [vmem:[#allocation2 + $0x40] sm:$0xff]
    %v101 = vld [vmem:[#allocation2 + $0x48] sm:$0xff]
    %v102 = vld [vmem:[#allocation2 + $0x50] sm:$0xff]
    %v103 = vld [vmem:[#allocation2 + $0x58] sm:$0xff]
    %v104 = vld [vmem:[#allocation2 + $0x60] sm:$0xff]
    %v105 = vld [vmem:[#allocation2 + $0x68] sm:$0xff]
    %v106 = vld [vmem:[#allocation2 + $0x70] sm:$0xff]
    %v107 = vld [vmem:[#allocation2 + $0x78] sm:$0xff]
    %v108 = vld [vmem:[#allocation2 + $0x80] sm:$0xff]
    %v109 = vld [vmem:[#allocation2 + $0x88] sm:$0xff]
    %v110 = vld [vmem:[#allocation2 + $0x90] sm:$0xff]
    %v111 = vld [vmem:[#allocation2 + $0x98] sm:$0xff]
    %v112 = vld [vmem:[#allocation2 + $0xa0] sm:$0xff]
    %v113 = vld [vmem:[#allocation2 + $0xa8] sm:$0xff]
    %v114 = vld [vmem:[#allocation2 + $0xb0] sm:$0xff]
    %v115 = vld [vmem:[#allocation2 + $0xb8] sm:$0xff]
    %v116 = vld [vmem:[#allocation2 + $0xc0] sm:$0xff]
    %v117 = vld [vmem:[#allocation2 + $0xc8] sm:$0xff]
    %v118 = vld [vmem:[#allocation2 + $0xd0] sm:$0xff]
    %v119 = vld [vmem:[#allocation2 + $0xd8] sm:$0xff]
    %v120 = vld [vmem:[#allocation2 + $0xe0] sm:$0xff]
    %v121 = vld [vmem:[#allocation2 + $0xe8] sm:$0xff]
    %v122 = vld [vmem:[#allocation2 + $0xf0] sm:$0xff]
    %v123 = vld [vmem:[#allocation2 + $0xf8] sm:$0xff]
    %v124 = vld [vmem:[#allocation2 + $0x100] sm:$0xff]
    %v125 = vld [vmem:[#allocation2 + $0x108] sm:$0xff]
    %v126 = vld [vmem:[#allocation2 + $0x110] sm:$0xff]
    %v127 = vld [vmem:[#allocation2 + $0x118] sm:$0xff]
    %v128 = vld [vmem:[#allocation2 + $0x120] sm:$0xff]
    %v129 = vld [vmem:[#allocation2 + $0x128] sm:$0xff]
    %v130 = vld [vmem:[#allocation2 + $0x130] sm:$0xff]
    %v131 = vld [vmem:[#allocation2 + $0x138] sm:$0xff]
    %v132 = vld [vmem:[#allocation2 + $0x140] sm:$0xff]
    %v133 = vld [vmem:[#allocation2 + $0x148] sm:$0xff]
    %v134 = vld [vmem:[#allocation2 + $0x150] sm:$0xff]
    %v135 = vld [vmem:[#allocation2 + $0x158] sm:$0xff]
    %v136 = vld [vmem:[#allocation2 + $0x160] sm:$0xff]
    %v137 = vld [vmem:[#allocation2 + $0x168] sm:$0xff]
    %v138 = vld [vmem:[#allocation2 + $0x170] sm:$0xff]
    %v139 = vld [vmem:[#allocation2 + $0x178] sm:$0xff]
    %v140 = vld [vmem:[#allocation2 + $0x180] sm:$0xff]
    %v141 = vld [vmem:[#allocation2 + $0x188] sm:$0xff]
    %v142 = vld [vmem:[#allocation2 + $0x190] sm:$0xff]
    %v143 = vld [vmem:[#allocation2 + $0x198] sm:$0xff]
    %v144 = vld [vmem:[#allocation2 + $0x1a0] sm:$0xff]
    %v145 = vld [vmem:[#allocation2 + $0x1a8] sm:$0xff]
    %v146 = vld [vmem:[#allocation2 + $0x1b0] sm:$0xff]
    %v147 = vld [vmem:[#allocation2 + $0x1b8] sm:$0xff]
    %v148 = vld [vmem:[#allocation2 + $0x1c0] sm:$0xff]
    %v149 = vld [vmem:[#allocation2 + $0x1c8] sm:$0xff]
    %v150 = vld [vmem:[#allocation2 + $0x1d0] sm:$0xff]
    %v151 = vld [vmem:[#allocation2 + $0x1d8] sm:$0xff]
    %v152 = vld [vmem:[#allocation2 + $0x1e0] sm:$0xff]
    %v153 = vld [vmem:[#allocation2 + $0x1e8] sm:$0xff]
    %v154 = vld [vmem:[#allocation2 + $0x1f0] sm:$0xff]
    %v155 = vld [vmem:[#allocation2 + $0x1f8] sm:$0xff]
    %v157 = vcombine.high %v91, %v91
    %v159 = vunpack.c.l.s4 1983009808
    %v160 = vunpack.c.0.s8 %v159
    %v161 = vlaneseq
    %v162 = vshrl.u32 %v161, 7
    %v163 = vsub.s32 %v160, %v162
    %v164 = vrot.slane %v91, %v163
    %v166 = vunpack.c.l.s4 1983009808
    %v167 = vunpack.c.0.s8 %v166
    %v168 = vlaneseq
    %v169 = vshrl.u32 %v168, 7
    %v170 = vsub.s32 %v167, %v169
    %v171 = vrot.slane %v157, %v170
    %v172 = vcombine.high %v164, %v164
    %v173 = vcombine.high %v171, %v171
    %178 = vmatprep.subr.mxu0 0.0
    %179 = vmatpush1.msra.mxu0 %v107
    %180 = vmatprep.subr.mxu0 0.0
    %181 = vmatpush1.msra.mxu0 %v106
    %182 = vmatprep.subr.mxu0 0.0
    %183 = vmatpush1.msra.mxu0 %v105
    %184 = vmatprep.subr.mxu0 0.0
    %185 = vmatpush1.msra.mxu0 %v104
    %186 = vmatprep.subr.mxu0 0.0
    %187 = vmatpush1.msra.mxu0 %v103
    %188 = vmatprep.subr.mxu0 0.0
    %189 = vmatpush1.msra.mxu0 %v102
    %190 = vmatprep.subr.mxu0 0.0
    %191 = vmatpush1.msra.mxu0 %v101
    %192 = vmatprep.subr.mxu0 0.0
    %193 = vmatpush1.msra.mxu0 %v100
    %194 = vmatprep.subr.mxu0 0.0
    %195 = vmatpush1.msra.mxu0 %v99
    %196 = vmatprep.subr.mxu0 0.0
    %197 = vmatpush1.msra.mxu0 %v98
    %198 = vmatprep.subr.mxu0 0.0
    %199 = vmatpush1.msra.mxu0 %v97
    %200 = vmatprep.subr.mxu0 0.0
    %201 = vmatpush1.msra.mxu0 %v96
    %202 = vmatprep.subr.mxu0 0.0
    %203 = vmatpush1.msra.mxu0 %v95
    %204 = vmatprep.subr.mxu0 0.0
    %205 = vmatpush1.msra.mxu0 %v94
    %206 = vmatprep.subr.mxu0 0.0
    %207 = vmatpush1.msra.mxu0 %v93
    %208 = vmatprep.subr.mxu0 0.0
    %209 = vmatpush1.msra.mxu0 %v92
    %210 = vmatprep.subr.mxu0 0.0
    %211 = vmatpush2.msra.mxu0 %v123
    %212 = vmatprep.subr.mxu0 0.0
    %213 = vmatpush2.msra.mxu0 %v122
    %214 = vmatprep.subr.mxu0 0.0
    %215 = vmatpush2.msra.mxu0 %v121
    %216 = vmatprep.subr.mxu0 0.0
    %217 = vmatpush2.msra.mxu0 %v120
    %218 = vmatprep.subr.mxu0 0.0
    %219 = vmatpush2.msra.mxu0 %v119
    %220 = vmatprep.subr.mxu0 0.0
    %221 = vmatpush2.msra.mxu0 %v118
    %222 = vmatprep.subr.mxu0 0.0
    %223 = vmatpush2.msra.mxu0 %v117
    %224 = vmatprep.subr.mxu0 0.0
    %225 = vmatpush2.msra.mxu0 %v116
    %226 = vmatprep.subr.mxu0 0.0
    %227 = vmatpush2.msra.mxu0 %v115
    %228 = vmatprep.subr.mxu0 0.0
    %229 = vmatpush2.msra.mxu0 %v114
    %230 = vmatprep.subr.mxu0 0.0
    %231 = vmatpush2.msra.mxu0 %v113
    %232 = vmatprep.subr.mxu0 0.0
    %233 = vmatpush2.msra.mxu0 %v112
    %234 = vmatprep.subr.mxu0 0.0
    %235 = vmatpush2.msra.mxu0 %v111
    %236 = vmatprep.subr.mxu0 0.0
    %237 = vmatpush2.msra.mxu0 %v110
    %238 = vmatprep.subr.mxu0 0.0
    %239 = vmatpush2.msra.mxu0 %v109
    %240 = vmatprep.subr.mxu0 0.0
    %241 = vmatpush2.msra.mxu0 %v108
    %242 = vmatprep.mubr.f32.mxu0 %v172
    %243 = vmatmul.mubr.f32.gmra.mxu0 %v164
    %v244 = vpop.f32.mrf.mxu0
    %v245 = vadd.f32 0.0, %v244
    %v246 = vpop.f32.mrf.mxu0
    %247 = vdwg.mxu0
    %248 = vmatprep.subr.mxu0 0.0
    %249 = vmatpush1.msra.mxu0 %v139
    %250 = vmatprep.subr.mxu0 0.0
    %251 = vmatpush1.msra.mxu0 %v138
    %252 = vmatprep.subr.mxu0 0.0
    %253 = vmatpush1.msra.mxu0 %v137
    %254 = vmatprep.subr.mxu0 0.0
    %255 = vmatpush1.msra.mxu0 %v136
    %256 = vmatprep.subr.mxu0 0.0
    %257 = vmatpush1.msra.mxu0 %v135
    %258 = vmatprep.subr.mxu0 0.0
    %259 = vmatpush1.msra.mxu0 %v134
    %260 = vmatprep.subr.mxu0 0.0
    %261 = vmatpush1.msra.mxu0 %v133
    %262 = vmatprep.subr.mxu0 0.0
    %263 = vmatpush1.msra.mxu0 %v132
    %264 = vmatprep.subr.mxu0 0.0
    %265 = vmatpush1.msra.mxu0 %v131
    %266 = vmatprep.subr.mxu0 0.0
    %267 = vmatpush1.msra.mxu0 %v130
    %268 = vmatprep.subr.mxu0 0.0
    %269 = vmatpush1.msra.mxu0 %v129
    %270 = vmatprep.subr.mxu0 0.0
    %271 = vmatpush1.msra.mxu0 %v128
    %272 = vmatprep.subr.mxu0 0.0
    %273 = vmatpush1.msra.mxu0 %v127
    %274 = vmatprep.subr.mxu0 0.0
    %275 = vmatpush1.msra.mxu0 %v126
    %276 = vmatprep.subr.mxu0 0.0
    %277 = vmatpush1.msra.mxu0 %v125
    %278 = vmatprep.subr.mxu0 0.0
    %279 = vmatpush1.msra.mxu0 %v124
    %280 = vmatprep.subr.mxu0 0.0
    %281 = vmatpush2.msra.mxu0 %v155
    %282 = vmatprep.subr.mxu0 0.0
    %283 = vmatpush2.msra.mxu0 %v154
    %284 = vmatprep.subr.mxu0 0.0
    %285 = vmatpush2.msra.mxu0 %v153
    %286 = vmatprep.subr.mxu0 0.0
    %287 = vmatpush2.msra.mxu0 %v152
    %288 = vmatprep.subr.mxu0 0.0
    %289 = vmatpush2.msra.mxu0 %v151
    %290 = vmatprep.subr.mxu0 0.0
    %291 = vmatpush2.msra.mxu0 %v150
    %292 = vmatprep.subr.mxu0 0.0
    %293 = vmatpush2.msra.mxu0 %v149
    %294 = vmatprep.subr.mxu0 0.0
    %295 = vmatpush2.msra.mxu0 %v148
    %296 = vmatprep.subr.mxu0 0.0
    %297 = vmatpush2.msra.mxu0 %v147
    %298 = vmatprep.subr.mxu0 0.0
    %299 = vmatpush2.msra.mxu0 %v146
    %300 = vmatprep.subr.mxu0 0.0
    %301 = vmatpush2.msra.mxu0 %v145
    %302 = vmatprep.subr.mxu0 0.0
    %303 = vmatpush2.msra.mxu0 %v144
    %304 = vmatprep.subr.mxu0 0.0
    %305 = vmatpush2.msra.mxu0 %v143
    %306 = vmatprep.subr.mxu0 0.0
    %307 = vmatpush2.msra.mxu0 %v142
    %308 = vmatprep.subr.mxu0 0.0
    %309 = vmatpush2.msra.mxu0 %v141
    %310 = vmatprep.subr.mxu0 0.0
    %311 = vmatpush2.msra.mxu0 %v140
    %312 = vmatprep.mubr.f32.mxu0 %v173
    %313 = vmatmul.mubr.f32.gmra.mxu0 %v171
    %v314 = vpop.f32.mrf.mxu0
    %v315 = vadd.f32 %v245, %v314
    %v316 = vpop.f32.mrf.mxu0
    %317 = vdwg.mxu0
    %v318 = vmul.f32 %v315, %v43
    %v319 = vmax.f32 %v318, 0.0
    %v320 = vld [vmem:[%s3] sm:$0xff]
    %vm321 = vcmask 64512
    %v323 = vsel %vm321, %v319, 0
    %325 = vmatprep.subr.mxu0 0.0
    %326 = vmatpush1.msra.mxu0 0.0
    %327 = vmatprep.subr.mxu0 0.0
    %328 = vmatpush1.msra.mxu0 0.0
    %329 = vmatprep.subr.mxu0 0.0
    %330 = vmatpush1.msra.mxu0 0.0
    %331 = vmatprep.subr.mxu0 0.0
    %332 = vmatpush1.msra.mxu0 0.0
    %333 = vmatprep.subr.mxu0 0.0
    %334 = vmatpush1.msra.mxu0 0.0
    %335 = vmatprep.subr.mxu0 0.0
    %336 = vmatpush1.msra.mxu0 0.0
    %337 = vmatprep.subr.mxu0 0.0
    %338 = vmatpush1.msra.mxu0 0.0
    %339 = vmatprep.subr.mxu0 0.0
    %340 = vmatpush1.msra.mxu0 0.0
    %341 = vmatprep.subr.mxu0 0.0
    %342 = vmatpush1.msra.mxu0 0.0
    %343 = vmatprep.subr.mxu0 0.0
    %344 = vmatpush1.msra.mxu0 0.0
    %345 = vmatprep.subr.mxu0 0.0
    %346 = vmatpush1.msra.mxu0 0.0
    %347 = vmatprep.subr.mxu0 0.0
    %348 = vmatpush1.msra.mxu0 0.0
    %349 = vmatprep.subr.mxu0 0.0
    %350 = vmatpush1.msra.mxu0 0.0
    %351 = vmatprep.subr.mxu0 0.0
    %352 = vmatpush1.msra.mxu0 0.0
    %353 = vmatprep.subr.mxu0 0.0
    %354 = vmatpush1.msra.mxu0 0.0
    %355 = vmatprep.subr.mxu0 0.0
    %356 = vmatpush1.msra.mxu0 %v320
    %357 = vmatprep.subr.mxu0 0.0
    %358 = vmatpush2.msra.mxu0 0.0
    %359 = vmatprep.subr.mxu0 0.0
    %360 = vmatpush2.msra.mxu0 0.0
    %361 = vmatprep.subr.mxu0 0.0
    %362 = vmatpush2.msra.mxu0 0.0
    %363 = vmatprep.subr.mxu0 0.0
    %364 = vmatpush2.msra.mxu0 0.0
    %365 = vmatprep.subr.mxu0 0.0
    %366 = vmatpush2.msra.mxu0 0.0
    %367 = vmatprep.subr.mxu0 0.0
    %368 = vmatpush2.msra.mxu0 0.0
    %369 = vmatprep.subr.mxu0 0.0
    %370 = vmatpush2.msra.mxu0 0.0
    %371 = vmatprep.subr.mxu0 0.0
    %372 = vmatpush2.msra.mxu0 0.0
    %373 = vmatprep.subr.mxu0 0.0
    %374 = vmatpush2.msra.mxu0 0.0
    %375 = vmatprep.subr.mxu0 0.0
    %376 = vmatpush2.msra.mxu0 0.0
    %377 = vmatprep.subr.mxu0 0.0
    %378 = vmatpush2.msra.mxu0 0.0
    %379 = vmatprep.subr.mxu0 0.0
    %380 = vmatpush2.msra.mxu0 0.0
    %381 = vmatprep.subr.mxu0 0.0
    %382 = vmatpush2.msra.mxu0 0.0
    %383 = vmatprep.subr.mxu0 0.0
    %384 = vmatpush2.msra.mxu0 0.0
    %385 = vmatprep.subr.mxu0 0.0
    %386 = vmatpush2.msra.mxu0 0.0
    %387 = vmatprep.subr.mxu0 0.0
    %388 = vmatpush2.msra.mxu0 0.0
    %389 = vmatprep.mubr.f32.mxu0 0.0
    %390 = vmatmul.mubr.f32.gmra.mxu0 %v323
    %v391 = vpop.f32.mrf.mxu0
    %v392 = vadd.f32 0.0, %v391
    %v393 = vpop.f32.mrf.mxu0
    %394 = vdwg.mxu0
    %v395 = vxor.u32 %v392, 2147483648
    %v396 = vmul.f32 %v395, 1.442695
    %v397 = vpow.pop %v396
    %v398 = vadd.f32 %v397, 1.0
    %v399 = vrcp.pop %v398
    %v400 = vmul.f32 1.0, %v399
    %v401 = vld [vmem:[%s4] sm:$0xff]
    %v402 = vld [vmem:[%s4 + $0x8] sm:$0xff]
    %v403 = vld [vmem:[%s4 + $0x10] sm:$0xff]
    %v404 = vld [vmem:[%s4 + $0x18] sm:$0xff]
    %v405 = vld [vmem:[%s4 + $0x20] sm:$0xff]
    %v406 = vld [vmem:[%s4 + $0x28] sm:$0xff]
    %v407 = vld [vmem:[%s4 + $0x30] sm:$0xff]
    %v408 = vld [vmem:[%s4 + $0x38] sm:$0xff]
    %v409 = vld [vmem:[%s4 + $0x40] sm:$0xff]
    %v410 = vld [vmem:[%s4 + $0x48] sm:$0xff]
    %v411 = vld [vmem:[%s4 + $0x50] sm:$0xff]
    %v412 = vld [vmem:[%s4 + $0x58] sm:$0xff]
    %v413 = vld [vmem:[%s4 + $0x60] sm:$0xff]
    %v414 = vld [vmem:[%s4 + $0x68] sm:$0xff]
    %v415 = vld [vmem:[%s4 + $0x70] sm:$0xff]
    %v416 = vld [vmem:[%s4 + $0x78] sm:$0xff]
    %v418 = vsel %vm68, %v400, 0
    %420 = vmatprep.subr.mxu0 0.0
    %421 = vmatpush1.msra.mxu0 0.0
    %422 = vmatprep.subr.mxu0 0.0
    %423 = vmatpush1.msra.mxu0 0.0
    %424 = vmatprep.subr.mxu0 0.0
    %425 = vmatpush1.msra.mxu0 0.0
    %426 = vmatprep.subr.mxu0 0.0
    %427 = vmatpush1.msra.mxu0 0.0
    %428 = vmatprep.subr.mxu0 0.0
    %429 = vmatpush1.msra.mxu0 0.0
    %430 = vmatprep.subr.mxu0 0.0
    %431 = vmatpush1.msra.mxu0 0.0
    %432 = vmatprep.subr.mxu0 0.0
    %433 = vmatpush1.msra.mxu0 0.0
    %434 = vmatprep.subr.mxu0 0.0
    %435 = vmatpush1.msra.mxu0 0.0
    %436 = vmatprep.subr.mxu0 0.0
    %437 = vmatpush1.msra.mxu0 0.0
    %438 = vmatprep.subr.mxu0 0.0
    %439 = vmatpush1.msra.mxu0 0.0
    %440 = vmatprep.subr.mxu0 0.0
    %441 = vmatpush1.msra.mxu0 0.0
    %442 = vmatprep.subr.mxu0 0.0
    %443 = vmatpush1.msra.mxu0 0.0
    %444 = vmatprep.subr.mxu0 %v414
    %445 = vmatpush1.msra.mxu0 %v413
    %446 = vmatprep.subr.mxu0 %v410
    %447 = vmatpush1.msra.mxu0 %v409
    %448 = vmatprep.subr.mxu0 %v406
    %449 = vmatpush1.msra.mxu0 %v405
    %450 = vmatprep.subr.mxu0 %v402
    %451 = vmatpush1.msra.mxu0 %v401
    %452 = vmatprep.subr.mxu0 0.0
    %453 = vmatpush2.msra.mxu0 0.0
    %454 = vmatprep.subr.mxu0 0.0
    %455 = vmatpush2.msra.mxu0 0.0
    %456 = vmatprep.subr.mxu0 0.0
    %457 = vmatpush2.msra.mxu0 0.0
    %458 = vmatprep.subr.mxu0 0.0
    %459 = vmatpush2.msra.mxu0 0.0
    %460 = vmatprep.subr.mxu0 0.0
    %461 = vmatpush2.msra.mxu0 0.0
    %462 = vmatprep.subr.mxu0 0.0
    %463 = vmatpush2.msra.mxu0 0.0
    %464 = vmatprep.subr.mxu0 0.0
    %465 = vmatpush2.msra.mxu0 0.0
    %466 = vmatprep.subr.mxu0 0.0
    %467 = vmatpush2.msra.mxu0 0.0
    %468 = vmatprep.subr.mxu0 0.0
    %469 = vmatpush2.msra.mxu0 0.0
    %470 = vmatprep.subr.mxu0 0.0
    %471 = vmatpush2.msra.mxu0 0.0
    %472 = vmatprep.subr.mxu0 0.0
    %473 = vmatpush2.msra.mxu0 0.0
    %474 = vmatprep.subr.mxu0 0.0
    %475 = vmatpush2.msra.mxu0 0.0
    %476 = vmatprep.subr.mxu0 0.0
    %477 = vmatpush2.msra.mxu0 0.0
    %478 = vmatprep.subr.mxu0 0.0
    %479 = vmatpush2.msra.mxu0 0.0
    %480 = vmatprep.subr.mxu0 0.0
    %481 = vmatpush2.msra.mxu0 0.0
    %482 = vmatprep.subr.mxu0 0.0
    %483 = vmatpush2.msra.mxu0 0.0
    %484 = vmatprep.mubr.f32.mxu0 0.0
    %485 = vmatmul.mubr.f32.gmra.mxu0 %v418
    %v486 = vpop.f32.mrf.mxu0
    %v487 = vadd.f32 0.0, %v486
    %v488 = vpop.f32.mrf.mxu0
    %v489 = vadd.f32 0.0, %v488
    %490 = vdwg.mxu0
    %491 = vmatprep.subr.mxu0 0.0
    %492 = vmatpush1.msra.mxu0 0.0
    %493 = vmatprep.subr.mxu0 0.0
    %494 = vmatpush1.msra.mxu0 0.0
    %495 = vmatprep.subr.mxu0 0.0
    %496 = vmatpush1.msra.mxu0 0.0
    %497 = vmatprep.subr.mxu0 0.0
    %498 = vmatpush1.msra.mxu0 0.0
    %499 = vmatprep.subr.mxu0 0.0
    %500 = vmatpush1.msra.mxu0 0.0
    %501 = vmatprep.subr.mxu0 0.0
    %502 = vmatpush1.msra.mxu0 0.0
    %503 = vmatprep.subr.mxu0 0.0
    %504 = vmatpush1.msra.mxu0 0.0
    %505 = vmatprep.subr.mxu0 0.0
    %506 = vmatpush1.msra.mxu0 0.0
    %507 = vmatprep.subr.mxu0 0.0
    %508 = vmatpush1.msra.mxu0 0.0
    %509 = vmatprep.subr.mxu0 0.0
    %510 = vmatpush1.msra.mxu0 0.0
    %511 = vmatprep.subr.mxu0 0.0
    %512 = vmatpush1.msra.mxu0 0.0
    %513 = vmatprep.subr.mxu0 0.0
    %514 = vmatpush1.msra.mxu0 0.0
    %515 = vmatprep.subr.mxu0 %v416
    %516 = vmatpush1.msra.mxu0 %v415
    %517 = vmatprep.subr.mxu0 %v412
    %518 = vmatpush1.msra.mxu0 %v411
    %519 = vmatprep.subr.mxu0 %v408
    %520 = vmatpush1.msra.mxu0 %v407
    %521 = vmatprep.subr.mxu0 %v404
    %522 = vmatpush1.msra.mxu0 %v403
    %523 = vmatprep.subr.mxu0 0.0
    %524 = vmatpush2.msra.mxu0 0.0
    %525 = vmatprep.subr.mxu0 0.0
    %526 = vmatpush2.msra.mxu0 0.0
    %527 = vmatprep.subr.mxu0 0.0
    %528 = vmatpush2.msra.mxu0 0.0
    %529 = vmatprep.subr.mxu0 0.0
    %530 = vmatpush2.msra.mxu0 0.0
    %531 = vmatprep.subr.mxu0 0.0
    %532 = vmatpush2.msra.mxu0 0.0
    %533 = vmatprep.subr.mxu0 0.0
    %534 = vmatpush2.msra.mxu0 0.0
    %535 = vmatprep.subr.mxu0 0.0
    %536 = vmatpush2.msra.mxu0 0.0
    %537 = vmatprep.subr.mxu0 0.0
    %538 = vmatpush2.msra.mxu0 0.0
    %539 = vmatprep.subr.mxu0 0.0
    %540 = vmatpush2.msra.mxu0 0.0
    %541 = vmatprep.subr.mxu0 0.0
    %542 = vmatpush2.msra.mxu0 0.0
    %543 = vmatprep.subr.mxu0 0.0
    %544 = vmatpush2.msra.mxu0 0.0
    %545 = vmatprep.subr.mxu0 0.0
    %546 = vmatpush2.msra.mxu0 0.0
    %547 = vmatprep.subr.mxu0 0.0
    %548 = vmatpush2.msra.mxu0 0.0
    %549 = vmatprep.subr.mxu0 0.0
    %550 = vmatpush2.msra.mxu0 0.0
    %551 = vmatprep.subr.mxu0 0.0
    %552 = vmatpush2.msra.mxu0 0.0
    %553 = vmatprep.subr.mxu0 0.0
    %554 = vmatpush2.msra.mxu0 0.0
    %555 = vmatprep.mubr.f32.mxu0 0.0
    %556 = vmatmul.mubr.f32.gmra.mxu0 %v418
    %v557 = vpop.f32.mrf.mxu0
    %v558 = vadd.f32 0.0, %v557
    %v559 = vpop.f32.mrf.mxu0
    %v560 = vadd.f32 0.0, %v559
    %561 = vdwg.mxu0
    %v566 = vcombine.low %v487, %v489
    %v567 = vcombine.low %v558, %v560
    %v569 = vunpack.c.l.s4 1983009808
    %v570 = vunpack.c.0.s8 %v569
    %v571 = vlaneseq
    %v572 = vshrl.u32 %v571, 7
    %v573 = vsub.s32 %v570, %v572
    %v574 = vrot.slane %v566, %v573
    %v576 = vunpack.c.l.s4 1983009808
    %v577 = vunpack.c.0.s8 %v576
    %v578 = vlaneseq
    %v579 = vshrl.u32 %v578, 7
    %v580 = vsub.s32 %v577, %v579
    %v581 = vrot.slane %v567, %v580
    %v582 = vcombine.low %v574, %v581
    %v584 = vmul.f32 %v34, %v582
    %585 = vst [vmem:[%s5] sm:$0xff] %v584
    // Predicated region
    $region26: #{_se1d_forward.1} parent=1 // pred_check
      _
    $region27: #{_se1d_forward.1} parent=1 // pred_check_branch
      %587 = sbr.rel (0) target = $region29
    $region28: #{_se1d_forward.1} parent=1 // pred_region
      _
    $region29: #{_se1d_forward.1} parent=1 // pred_fallthru
      _
    // Predicated region
    $region30: #{_se1d_forward.1} parent=1 // pred_check
      _
    $region31: #{_se1d_forward.1} parent=1 // pred_check_branch
      %589 = sbr.rel (0) target = $region33
    $region32: #{_se1d_forward.1} parent=1 // pred_region
      _
    $region33: #{_se1d_forward.1} parent=1 // pred_fallthru
      _
    %590 = vsyncpa [#allocation3], 1

</llo_original>
